<compile_context>
chip_gen: v6e
topology: v6e:2x2x1
jax: 0.10.0
libtpu: 0.0.40
codegen_flags: <defaults>
</compile_context>

<pallas_src>
import functools

import jax
import jax.numpy as jnp
from jax import lax
from jax.experimental import pallas as pl
from jax.experimental.pallas import tpu as pltpu


def _round_up(v, m):
    return ((v + m - 1) // m) * m


def _ls_ce_kernel(x_ref, tgt_ref, loss_ref, *, smoothing, n_valid, tile_n):
    """One row-tile of label-smoothed cross entropy.

    x_ref:    (tile_n, C) logits (any float dtype; accumulated in f32)
    tgt_ref:  (tile_n, 1) int32 target class indices
    loss_ref: (tile_n, 1) f32 per-row loss (padded rows written as 0)
    """
    confidence = 1.0 - smoothing

    x = x_ref[...].astype(jnp.float32)                 # (tile_n, C)
    tn, c = x.shape

    # Row-wise logsumexp.  The "- lse" of log_softmax is folded into the
    # per-row scalars below instead of materializing a (tile_n, C) logprobs.
    m = jnp.max(x, axis=-1, keepdims=True)             # (tile_n, 1)
    shifted = x - m                                    # (tile_n, C)
    lse = jnp.log(jnp.sum(jnp.exp(shifted), axis=-1, keepdims=True))  # (tile_n, 1)

    # Gather shifted[row, target[row]] via a one-hot compare (no per-row
    # dynamic gather on TPU).
    col = lax.broadcasted_iota(jnp.int32, (tn, c), 1)
    tgt = tgt_ref[...]                                 # (tile_n, 1) int32
    picked = jnp.sum(jnp.where(col == tgt, shifted, 0.0),
                     axis=-1, keepdims=True)           # (tile_n, 1)

    nll_loss = lse - picked                            # -logprob[target]
    smooth_loss = lse - jnp.sum(shifted, axis=-1, keepdims=True) / jnp.float32(c)

    loss = confidence * nll_loss + smoothing * smooth_loss   # (tile_n, 1)

    # Static check: mask only generated when N is not a multiple of tile_n.
    if n_valid % tile_n != 0:
        row = pl.program_id(0) * tile_n + lax.broadcasted_iota(jnp.int32, (tn, 1), 0)
        loss = jnp.where(row < n_valid, loss, 0.0)

    loss_ref[...] = loss


def label_smoothing_cross_entropy(x, target, smoothing=0.1, tile_n=None):
    """x: (N, C) float logits; target: (N,) int class indices. Returns scalar mean loss."""
    assert smoothing < 1.0
    n, c = x.shape
    itemsize = jnp.dtype(x.dtype).itemsize

    if tile_n is None:
        # ~2 MiB of logits per block; with double buffering (~4 MiB per input)
        # this stays well inside the default scoped-VMEM limit on v5e/v6e/v7x.
        budget_bytes = 2 * 1024 * 1024
        max_rows = max(8, (budget_bytes // max(1, c * itemsize)) // 8 * 8)
        tile_n = min(512, max_rows, _round_up(n, 8))
    assert tile_n % 8 == 0, "tile_n must be a multiple of 8 (sublane tiling)"

    n_pad = _round_up(n, tile_n)
    num_tiles = n_pad // tile_n

    tgt = target.astype(jnp.int32).reshape(n, 1)
    if n_pad != n:
        # Zero-padded rows are finite through the math and masked in-kernel.
        x = jnp.pad(x, ((0, n_pad - n), (0, 0)))
        tgt = jnp.pad(tgt, ((0, n_pad - n), (0, 0)))

    kernel = functools.partial(
        _ls_ce_kernel, smoothing=float(smoothing), n_valid=n, tile_n=tile_n)

    per_row_loss = pl.pallas_call(
        kernel,
        grid=(num_tiles,),
        in_specs=[
            pl.BlockSpec((tile_n, c), lambda i: (i, 0)),   # logits tile
            pl.BlockSpec((tile_n, 1), lambda i: (i, 0)),   # targets tile
        ],
        out_specs=pl.BlockSpec((tile_n, 1), lambda i: (i, 0)),
        out_shape=jax.ShapeDtypeStruct((n_pad, 1), jnp.float32),
        compiler_params=pltpu.CompilerParams(
            dimension_semantics=("parallel",)),            # megacore on v7x
        cost_estimate=pl.CostEstimate(
            flops=int(5 * n_pad * c),
            transcendentals=int(n_pad * c + n_pad),
            bytes_accessed=int(n_pad * c * itemsize + n_pad * 4 + n_pad * 4)),
    )(x, tgt)

    # Tiny writeback (N*4 bytes) + final reduction in the wrapper keeps the
    # grid axis dependency-free ("parallel").  Divide by the true N.
    return jnp.sum(per_row_loss) / jnp.float32(n)

    # TODO(synk): for vocab-scale C (>= ~8-32k) add a second "arbitrary" grid
    # axis over C with an online (flash-style) logsumexp so a useful TILE_N
    # still fits v7x's 64 MiB VMEM.


def _reference(x, target, smoothing=0.1):
    confidence = 1.0 - smoothing
    logprobs = jax.nn.log_softmax(x.astype(jnp.float32), axis=-1)
    nll = -jnp.take_along_axis(
        logprobs, target[:, None].astype(jnp.int32), axis=-1)[:, 0]
    smooth = -jnp.mean(logprobs, axis=-1)
    return jnp.mean(confidence * nll + smoothing * smooth)


if __name__ == "__main__":
    key = jax.random.PRNGKey(0)
    k1, k2, k3, k4 = jax.random.split(key, 4)

    # Test 1: small f32 case (batch=8, classes=32), single tile.
    N, C = 8, 32
    x = jax.random.normal(k1, (N, C), dtype=jnp.float32)
    target = jax.random.randint(k2, (N,), 0, C, dtype=jnp.int32)
    loss = jax.block_until_ready(label_smoothing_cross_entropy(x, target, smoothing=0.1))
    ref = _reference(x, target, smoothing=0.1)
    assert jnp.allclose(loss, ref, atol=1e-5, rtol=1e-5), (loss, ref)

    # Test 2: bf16 logits, ragged N (exercises multi-tile grid + row padding).
    N2, C2 = 50, 160
    x2 = jax.random.normal(k3, (N2, C2), dtype=jnp.bfloat16)
    target2 = jax.random.randint(k4, (N2,), 0, C2, dtype=jnp.int32)
    loss2 = jax.block_until_ready(
        label_smoothing_cross_entropy(x2, target2, smoothing=0.1, tile_n=16))
    ref2 = _reference(x2, target2, smoothing=0.1)
    assert jnp.allclose(loss2, ref2, atol=1e-4, rtol=1e-4), (loss2, ref2)

    print("KERNEL_OK")
</pallas_src>

<mosaic_0001>
module attributes {stable_mosaic.version = 11 : i64} {
  func.func @_ls_ce_kernel(%arg0: i32, %arg1: memref<8x32xf32, #tpu.memory_space<vmem>>, %arg2: memref<8x1xi32, #tpu.memory_space<vmem>>, %arg3: memref<8x1xf32, #tpu.memory_space<vmem>>) attributes {dimension_semantics = [#tpu.dimension_semantics<parallel>], iteration_bounds = array<i64: 1>, scalar_prefetch = 0 : i64, scratch_operands = 0 : i64, tpu.core_type = #tpu.core_type<tc>, window_params = [{transform_indices = @transform_0, window_bounds = array<i64: 8, 32>}, {transform_indices = @transform_1, window_bounds = array<i64: 8, 1>}, {transform_indices = @transform_2, window_bounds = array<i64: 8, 1>}]} {
    %c0 = arith.constant 0 : index
    %c0_0 = arith.constant 0 : index
    %0 = vector.load %arg1[%c0, %c0_0] : memref<8x32xf32, #tpu.memory_space<vmem>>, vector<8x32xf32>
    %cst = arith.constant dense<0xFF800000> : vector<8xf32>
    %1 = vector.multi_reduction <maximumf>, %0, %cst [1] : vector<8x32xf32> to vector<8xf32>
    %2 = vector.shape_cast %1 : vector<8xf32> to vector<8x1xf32>
    %3 = vector.broadcast %2 : vector<8x1xf32> to vector<8x32xf32>
    %4 = arith.subf %0, %3 : vector<8x32xf32>
    %5 = math.exp %4 : vector<8x32xf32>
    %cst_1 = arith.constant dense<0.000000e+00> : vector<8xf32>
    %6 = vector.multi_reduction <add>, %5, %cst_1 [1] : vector<8x32xf32> to vector<8xf32>
    %7 = vector.shape_cast %6 : vector<8xf32> to vector<8x1xf32>
    %8 = math.log %7 : vector<8x1xf32>
    %9 = tpu.iota {dimensions = array<i32: 1>} : vector<8x32xi32>
    %c0_2 = arith.constant 0 : index
    %c0_3 = arith.constant 0 : index
    %10 = vector.load %arg2[%c0_2, %c0_3] : memref<8x1xi32, #tpu.memory_space<vmem>>, vector<8x1xi32>
    %11 = vector.broadcast %10 : vector<8x1xi32> to vector<8x32xi32>
    %12 = arith.cmpi eq, %9, %11 : vector<8x32xi32>
    %cst_4 = arith.constant 0.000000e+00 : f32
    %13 = vector.broadcast %cst_4 : f32 to vector<8x32xf32>
    %14 = arith.select %12, %4, %13 : vector<8x32xi1>, vector<8x32xf32>
    %cst_5 = arith.constant dense<0.000000e+00> : vector<8xf32>
    %15 = vector.multi_reduction <add>, %14, %cst_5 [1] : vector<8x32xf32> to vector<8xf32>
    %16 = vector.shape_cast %15 : vector<8xf32> to vector<8x1xf32>
    %17 = arith.subf %8, %16 : vector<8x1xf32>
    %cst_6 = arith.constant dense<0.000000e+00> : vector<8xf32>
    %18 = vector.multi_reduction <add>, %4, %cst_6 [1] : vector<8x32xf32> to vector<8xf32>
    %19 = vector.shape_cast %18 : vector<8xf32> to vector<8x1xf32>
    %cst_7 = arith.constant 3.200000e+01 : f32
    %20 = vector.broadcast %cst_7 : f32 to vector<8x1xf32>
    %21 = arith.divf %19, %20 : vector<8x1xf32>
    %22 = arith.subf %8, %21 : vector<8x1xf32>
    %cst_8 = arith.constant 0.899999976 : f32
    %23 = vector.broadcast %cst_8 : f32 to vector<8x1xf32>
    %24 = arith.mulf %23, %17 : vector<8x1xf32>
    %cst_9 = arith.constant 1.000000e-01 : f32
    %25 = vector.broadcast %cst_9 : f32 to vector<8x1xf32>
    %26 = arith.mulf %25, %22 : vector<8x1xf32>
    %27 = arith.addf %24, %26 : vector<8x1xf32>
    %c0_10 = arith.constant 0 : index
    %c0_11 = arith.constant 0 : index
    %28 = vector.load %arg3[%c0_10, %c0_11] : memref<8x1xf32, #tpu.memory_space<vmem>>, vector<8x1xf32>
    tpu.vector_store %arg3[%c0_10, %c0_11], %27 {strides = array<i32>} : memref<8x1xf32, #tpu.memory_space<vmem>>, vector<8x1xf32>,
    return
  }
  func.func @transform_0(%arg0: i32) -> (i32, i32) {
    %c0_i32 = arith.constant 0 : i32
    %c0_i32_0 = arith.constant 0 : i32
    return %arg0, %c0_i32 : i32, i32
  }
  func.func @transform_1(%arg0: i32) -> (i32, i32) {
    %c0_i32 = arith.constant 0 : i32
    %c0_i32_0 = arith.constant 0 : i32
    return %arg0, %c0_i32 : i32, i32
  }
  func.func @transform_2(%arg0: i32) -> (i32, i32) {
    %c0_i32 = arith.constant 0 : i32
    %c0_i32_0 = arith.constant 0 : i32
    return %arg0, %c0_i32 : i32, i32
  }
}

</mosaic_0001>

<llo_original>
// kernel: tpu_custom_call.1
$region0: #{tpu_custom_call.1}
  #allocation0 [shape = 'u32[]', space=smem, size = 0x4, offset = 0x4, fixed_abs, tag = 'smem constant byte address 0x4 - core index']
  #allocation1 [shape = 'u32[144,128]{1,0:T(1,128)}', space=vmem, size = 0x12000, scoped, tag = 'internal scratch']
  %s0 = inlined_call_operand.vmem [shape: f32[8,32], index: 0, kind: input, shape index: {}]
  %s1 = inlined_call_operand.vmem [shape: s32[8,1], index: 1, kind: input, shape index: {}]
  %s2 = inlined_call_operand.vmem [shape: f32[8,1], index: 2, kind: output, shape index: {}]
  %s3 = sld [smem:[#allocation0]]
  $region18: #{tpu_custom_call.1} parent=0
    _
  %s5 = ssub.s32 1, %s3
  %s6 = scalar_select 0, %s5, %s3
  // Predicated region
  $region2: #{tpu_custom_call.1} parent=0 // pred_check
    _
  $region3: #{tpu_custom_call.1} parent=0 // pred_check_branch
    %8 = sbr.rel (0) target = $region5
  $region4: #{tpu_custom_call.1} parent=0 // pred_region
    _
  $region5: #{tpu_custom_call.1} parent=0 // pred_fallthru
    _
  // Predicated region
  $region6: #{tpu_custom_call.1} parent=0 // pred_check
    _
  $region7: #{tpu_custom_call.1} parent=0 // pred_check_branch
    %10 = sbr.rel (0) target = $region9
  $region8: #{tpu_custom_call.1} parent=0 // pred_region
    _
  $region9: #{tpu_custom_call.1} parent=0 // pred_fallthru
    _
  %v11 = vld [vmem:[%s0] sm:$0xff]
  %vm12 = vcmask 261120
  %v13 = vsel %vm12, %v11, -inf
  %14 = vmax.xlane.f32.xlu0 %v13
  %v15 = vpop.xlane.xlu0 %14
  %v16 = vsub.f32 %v11, %v15
  %v17 = vmul.f32 %v16, 1.442695
  %v18 = vpow.pop %v17
  %v19 = vsel %vm12, %v18, 0.0
  %20 = vadd.xlane.f32.xlu0 %v19
  %v21 = vpop.xlane.xlu0 %20
  %v22 = vlog2.pop %v21
  %v23 = vmul.f32 %v22, 0.6931472
  %v24 = vlaneseq
  %v25 = vand.u32 %v24, 127
  %v26 = vld [vmem:[%s1] sm:$0xff]
  %27 = vset.pattern.permute.xlu0 0
  %28 = vperm.xlu0 %27, %v26
  %v29 = vpop.permute.xlu0 %28
  %vm30 = vcmp.eq.s32.totalorder %v25, %v29
  %v31 = vsel %vm30, %v16, 0.0
  %v32 = vsel %vm12, %v31, 0.0
  %33 = vadd.xlane.f32.xlu0 %v32
  %v34 = vpop.xlane.xlu0 %33
  %v35 = vsub.f32 %v23, %v34
  %v36 = vsel %vm12, %v16, 0.0
  %37 = vadd.xlane.f32.xlu0 %v36
  %v38 = vpop.xlane.xlu0 %37
  %v39 = vrcp.pop 32.0
  %v40 = vmul.f32 %v38, %v39
  %v41 = vsub.f32 %v23, %v40
  %v42 = vmul.f32 %v35, 0.9
  %v43 = vmul.f32 %v41, 0.1
  %v44 = vadd.f32 %v42, %v43
  %vm45 = vcmask 7168
  %46 = vst.msk [vmem:[%s2] sm:$0xff] %vm45, %v44
  // Predicated region
  $region10: #{tpu_custom_call.1} parent=0 // pred_check
    _
  $region11: #{tpu_custom_call.1} parent=0 // pred_check_branch
    %48 = sbr.rel (0) target = $region13
  $region12: #{tpu_custom_call.1} parent=0 // pred_region
    _
  $region13: #{tpu_custom_call.1} parent=0 // pred_fallthru
    _
  // Predicated region
  $region14: #{tpu_custom_call.1} parent=0 // pred_check
    _
  $region15: #{tpu_custom_call.1} parent=0 // pred_check_branch
    %50 = sbr.rel (0) target = $region17
  $region16: #{tpu_custom_call.1} parent=0 // pred_region
    _
  $region17: #{tpu_custom_call.1} parent=0 // pred_fallthru
    _

</llo_original>
